<compile_context>
chip_gen: v7x
topology: tpu7x:2x2x1
jax: 0.10.0
libtpu: 0.0.40
codegen_flags: <defaults>
</compile_context>

<pallas_src>
import functools

import jax
import jax.numpy as jnp
from jax.experimental import pallas as pl
from jax.experimental.pallas import tpu as pltpu

TILE_M_MAX = 1024   # upper bound on rows per grid step (working set stays < 1 MiB)


def _round_up(n, m):
    return (n + m - 1) // m * m


def _choose_tile_m(n_rows):
    """Adaptive row tile: no giant pad for tiny N, >=2 grid steps when possible
    (v7x megacore), large tiles for large N (amortize per-step overhead)."""
    n8 = _round_up(max(n_rows, 8), 8)
    if n8 <= 16:
        return 8
    if n8 <= 2 * TILE_M_MAX:
        return _round_up(pl.cdiv(n8, 2), 8)   # aim for exactly 2 tiles
    return TILE_M_MAX


# ----------------------------- Pallas kernels --------------------------------

def mdn_composed_kernel(x_ref, w_ref, b_ref, o_ref):
    """Pre-composed affine map: one matmul, in-kernel cast, f32 acc + bias."""
    x = x_ref[...].astype(w_ref.dtype)
    acc = jnp.dot(x, w_ref[...], preferred_element_type=jnp.float32)
    o_ref[...] = (acc + b_ref[...]).astype(o_ref.dtype)


def mdn_fused_kernel(x_ref,
                     w1_ref, b1_ref,
                     w2_ref, b2_ref,
                     w3_ref, b3_ref,
                     w4_ref, b4_ref,
                     o_ref):
    """Fused 4-Linear chain (module-structure faithful path)."""
    cdt = w1_ref.dtype
    # phoneme_encoder
    h = jnp.dot(x_ref[...].astype(cdt), w1_ref[...],
                preferred_element_type=jnp.float32) + b1_ref[...]
    # phoneme_decoder
    h = jnp.dot(h.astype(cdt), w2_ref[...],
                preferred_element_type=jnp.float32) + b2_ref[...]
    # word_decoder
    h = jnp.dot(h.astype(cdt), w3_ref[...],
                preferred_element_type=jnp.float32) + b3_ref[...]
    # classification_head (MDNClassificationHead -> nn.Linear)
    h = jnp.dot(h.astype(cdt), w4_ref[...],
                preferred_element_type=jnp.float32) + b4_ref[...]
    o_ref[...] = h.astype(o_ref.dtype)


# --------------------- one-time parameter preparation -------------------------

def prepare_composed_params(params, compute_dtype=jnp.bfloat16):
    """Fold the purely-affine chain into (W, b) ONCE, outside the forward path.

    Only valid while phoneme_encoder / phoneme_decoder / word_decoder are
    purely affine (they are realized as nn.Linear here).
    TODO(synk): if the injected modules ever contain nonlinearities / norms /
    dropout, use mdn_forward_fused instead of this precomposed path.
    """
    (w1, b1), (w2, b2), (w3, b3), (w4, b4) = params
    w = w1 @ w2 @ w3 @ w4                                   # composed in f32
    b = ((b1 @ w2 + b2) @ w3 + b3) @ w4 + b4
    return w.astype(compute_dtype), b.astype(jnp.float32)


# ------------------------------- forward paths --------------------------------

@jax.jit
def mdn_forward_composed(x, w_c, b_c):
    """x: [B, S, D_in] f32; w_c: [D_in, OUT] (bf16/f32); b_c: [1, OUT] f32."""
    B, S, d_in = x.shape
    out_dim = w_c.shape[1]
    N = B * S

    tile_m = _choose_tile_m(N)
    n_pad = _round_up(N, tile_m)

    x2d = x.reshape(N, d_in)                 # free reshape; no pad/cast copy
    if n_pad != N:
        x2d = jnp.pad(x2d, ((0, n_pad - N), (0, 0)))

    const_map = lambda i: (0, 0)             # weights/bias resident across grid
    row_map = lambda i: (i, 0)               # row-tiled activations / output
    grid = (n_pad // tile_m,)

    bytes_accessed = int(
        n_pad * d_in * x.dtype.itemsize
        + w_c.size * w_c.dtype.itemsize
        + b_c.size * 4
        + n_pad * out_dim * 4)
    cost = pl.CostEstimate(flops=2 * n_pad * d_in * out_dim,
                           transcendentals=0,
                           bytes_accessed=bytes_accessed)

    out2d = pl.pallas_call(
        mdn_composed_kernel,
        out_shape=jax.ShapeDtypeStruct((n_pad, out_dim), jnp.float32),
        grid_spec=pltpu.PrefetchScalarGridSpec(
            num_scalar_prefetch=0,
            grid=grid,
            in_specs=[pl.BlockSpec((tile_m, d_in), row_map),
                      pl.BlockSpec((d_in, out_dim), const_map),
                      pl.BlockSpec((1, out_dim), const_map)],
            out_specs=pl.BlockSpec((tile_m, out_dim), row_map),
        ),
        compiler_params=pltpu.CompilerParams(
            dimension_semantics=("parallel",),   # row tiles shard across TCs
        ),
        cost_estimate=cost,
    )(x2d, w_c, b_c)

    if n_pad != N:
        out2d = out2d[:N]
    return out2d.reshape(B, S, out_dim)


@functools.partial(jax.jit, static_argnames=("compute_dtype",))
def mdn_forward_fused(x, params, compute_dtype=jnp.float32):
    """Module-structure-faithful 4-matmul fused path (correctness reference)."""
    (w1, b1), (w2, b2), (w3, b3), (w4, b4) = params
    B, S, d_in = x.shape
    out_dim = w4.shape[1]
    N = B * S

    tile_m = _choose_tile_m(N)
    n_pad = _round_up(N, tile_m)

    x2d = x.reshape(N, d_in)
    if n_pad != N:
        x2d = jnp.pad(x2d, ((0, n_pad - N), (0, 0)))

    const_map = lambda i: (0, 0)
    row_map = lambda i: (i, 0)

    weight_args = []
    weight_specs = []
    for (wq, bq) in ((w1, b1), (w2, b2), (w3, b3), (w4, b4)):
        weight_args += [wq.astype(compute_dtype), bq.astype(jnp.float32)]
        weight_specs += [pl.BlockSpec(wq.shape, const_map),
                         pl.BlockSpec((1, bq.shape[-1]), const_map)]

    out2d = pl.pallas_call(
        mdn_fused_kernel,
        out_shape=jax.ShapeDtypeStruct((n_pad, out_dim), jnp.float32),
        grid_spec=pltpu.PrefetchScalarGridSpec(
            num_scalar_prefetch=0,
            grid=(n_pad // tile_m,),
            in_specs=[pl.BlockSpec((tile_m, d_in), row_map)] + weight_specs,
            out_specs=pl.BlockSpec((tile_m, out_dim), row_map),
        ),
        compiler_params=pltpu.CompilerParams(
            dimension_semantics=("parallel",),
        ),
    )(x2d, *weight_args)

    if n_pad != N:
        out2d = out2d[:N]
    return out2d.reshape(B, S, out_dim)


# ------------------------- parameter initialization --------------------------

def make_linear_params(key, d_in, d_out):
    """PyTorch-style Linear init (uniform bound 1/sqrt(d_in)), stored [in, out]."""
    kw, kb = jax.random.split(key)
    bound = 1.0 / (d_in ** 0.5)
    w = jax.random.uniform(kw, (d_in, d_out), jnp.float32, -bound, bound)
    b = jax.random.uniform(kb, (1, d_out), jnp.float32, -bound, bound)
    return w, b


# ----------------------------------- main ------------------------------------

if __name__ == "__main__":
    # Small, forward-consistent shapes.
    B, S = 2, 8            # batch, sequence of phoneme frames
    D_IN = 64              # phoneme feature dim fed to the encoder
    ENC_DIM = 128          # phoneme_encoder output dim
    PH_DEC_DIM = 96        # phoneme_decoder output dim
    MDN_CLF_IN_DIM = 64    # word_decoder output dim == classification head input
    MDN_CLF_OUT_DIM = 8    # classification head output dim

    key = jax.random.PRNGKey(0)
    k_x, k1, k2, k3, k4 = jax.random.split(key, 5)

    x = jax.random.normal(k_x, (B, S, D_IN), jnp.float32)

    params = (
        make_linear_params(k1, D_IN, ENC_DIM),                     # phoneme_encoder
        make_linear_params(k2, ENC_DIM, PH_DEC_DIM),               # phoneme_decoder
        make_linear_params(k3, PH_DEC_DIM, MDN_CLF_IN_DIM),        # word_decoder
        make_linear_params(k4, MDN_CLF_IN_DIM, MDN_CLF_OUT_DIM),   # clf head
    )

    # Plain-JAX reference of the 4-Linear forward pass (f32).
    ref = x.reshape(B * S, D_IN)
    for (w, b) in params:
        ref = ref @ w + b
    ref = ref.reshape(B, S, MDN_CLF_OUT_DIM)

    # Path 1: fused 4-matmul kernel in f32 (module-structure-faithful, tight check).
    out_f32 = mdn_forward_fused(x, params, compute_dtype=jnp.float32)
    out_f32 = jax.block_until_ready(out_f32)
    assert out_f32.shape == (B, S, MDN_CLF_OUT_DIM)
    assert jnp.allclose(out_f32, ref, atol=1e-3, rtol=1e-3)

    # Path 2 (default / fastest): weights precomposed + cast ONCE at prep time,
    # single-matmul kernel reads raw f32 x (cast in-kernel), narrow 8-col output.
    w_c, b_c = prepare_composed_params(params, compute_dtype=jnp.bfloat16)
    out_bf16 = mdn_forward_composed(x, w_c, b_c)
    out_bf16 = jax.block_until_ready(out_bf16)
    assert out_bf16.shape == (B, S, MDN_CLF_OUT_DIM)
    assert jnp.allclose(out_bf16, ref, atol=5e-2, rtol=5e-2)

    # TODO(synk): phoneme_encoder / phoneme_decoder / word_decoder are abstract
    # injected nn.Modules in the original code; they are realized here as Linear
    # layers since no concrete architecture is specified.
    print("KERNEL_OK")
</pallas_src>

<mosaic_0001>
module attributes {stable_mosaic.version = 11 : i64} {
  func.func @mdn_fused_kernel(%arg0: i32, %arg1: memref<8x64xf32, #tpu.memory_space<vmem>>, %arg2: memref<64x128xf32, #tpu.memory_space<vmem>>, %arg3: memref<1x128xf32, #tpu.memory_space<vmem>>, %arg4: memref<128x96xf32, #tpu.memory_space<vmem>>, %arg5: memref<1x96xf32, #tpu.memory_space<vmem>>, %arg6: memref<96x64xf32, #tpu.memory_space<vmem>>, %arg7: memref<1x64xf32, #tpu.memory_space<vmem>>, %arg8: memref<64x8xf32, #tpu.memory_space<vmem>>, %arg9: memref<1x8xf32, #tpu.memory_space<vmem>>, %arg10: memref<8x8xf32, #tpu.memory_space<vmem>>) attributes {dimension_semantics = [#tpu.dimension_semantics<parallel>], iteration_bounds = array<i64: 2>, scalar_prefetch = 0 : i64, scratch_operands = 0 : i64, tpu.core_type = #tpu.core_type<tc>, window_params = [{transform_indices = @transform_0, window_bounds = array<i64: 8, 64>}, {pipeline_mode = #tpu.pipeline_mode<synchronous>, transform_indices = @transform_1, window_bounds = array<i64: 64, 128>}, {pipeline_mode = #tpu.pipeline_mode<synchronous>, transform_indices = @transform_2, window_bounds = array<i64: 1, 128>}, {pipeline_mode = #tpu.pipeline_mode<synchronous>, transform_indices = @transform_3, window_bounds = array<i64: 128, 96>}, {pipeline_mode = #tpu.pipeline_mode<synchronous>, transform_indices = @transform_4, window_bounds = array<i64: 1, 96>}, {pipeline_mode = #tpu.pipeline_mode<synchronous>, transform_indices = @transform_5, window_bounds = array<i64: 96, 64>}, {pipeline_mode = #tpu.pipeline_mode<synchronous>, transform_indices = @transform_6, window_bounds = array<i64: 1, 64>}, {pipeline_mode = #tpu.pipeline_mode<synchronous>, transform_indices = @transform_7, window_bounds = array<i64: 64, 8>}, {pipeline_mode = #tpu.pipeline_mode<synchronous>, transform_indices = @transform_8, window_bounds = array<i64: 1, 8>}, {transform_indices = @transform_9, window_bounds = array<i64: 8, 8>}]} {
    %c0 = arith.constant 0 : index
    %c0_0 = arith.constant 0 : index
    %0 = vector.load %arg1[%c0, %c0_0] : memref<8x64xf32, #tpu.memory_space<vmem>>, vector<8x64xf32>
    %c0_1 = arith.constant 0 : index
    %c0_2 = arith.constant 0 : index
    %1 = vector.load %arg2[%c0_1, %c0_2] : memref<64x128xf32, #tpu.memory_space<vmem>>, vector<64x128xf32>
    %cst = arith.constant dense<0.000000e+00> : vector<8x128xf32>
    %2 = tpu.matmul %0, %1, %cst {dimension_numbers = #tpu.dot_dimension_numbers<[1], [0], [0], [1], [0, 0, 1, 1], [], []>} : vector<8x64xf32>, vector<64x128xf32>, vector<8x128xf32> -> vector<8x128xf32>
    %c0_3 = arith.constant 0 : index
    %c0_4 = arith.constant 0 : index
    %3 = vector.load %arg3[%c0_3, %c0_4] : memref<1x128xf32, #tpu.memory_space<vmem>>, vector<1x128xf32>
    %4 = vector.broadcast %3 : vector<1x128xf32> to vector<8x128xf32>
    %5 = arith.addf %2, %4 : vector<8x128xf32>
    %c0_5 = arith.constant 0 : index
    %c0_6 = arith.constant 0 : index
    %6 = vector.load %arg4[%c0_5, %c0_6] : memref<128x96xf32, #tpu.memory_space<vmem>>, vector<128x96xf32>
    %cst_7 = arith.constant dense<0.000000e+00> : vector<8x96xf32>
    %7 = tpu.matmul %5, %6, %cst_7 {dimension_numbers = #tpu.dot_dimension_numbers<[1], [0], [0], [1], [0, 0, 1, 1], [], []>} : vector<8x128xf32>, vector<128x96xf32>, vector<8x96xf32> -> vector<8x96xf32>
    %c0_8 = arith.constant 0 : index
    %c0_9 = arith.constant 0 : index
    %8 = vector.load %arg5[%c0_8, %c0_9] : memref<1x96xf32, #tpu.memory_space<vmem>>, vector<1x96xf32>
    %9 = vector.broadcast %8 : vector<1x96xf32> to vector<8x96xf32>
    %10 = arith.addf %7, %9 : vector<8x96xf32>
    %c0_10 = arith.constant 0 : index
    %c0_11 = arith.constant 0 : index
    %11 = vector.load %arg6[%c0_10, %c0_11] : memref<96x64xf32, #tpu.memory_space<vmem>>, vector<96x64xf32>
    %cst_12 = arith.constant dense<0.000000e+00> : vector<8x64xf32>
    %12 = tpu.matmul %10, %11, %cst_12 {dimension_numbers = #tpu.dot_dimension_numbers<[1], [0], [0], [1], [0, 0, 1, 1], [], []>} : vector<8x96xf32>, vector<96x64xf32>, vector<8x64xf32> -> vector<8x64xf32>
    %c0_13 = arith.constant 0 : index
    %c0_14 = arith.constant 0 : index
    %13 = vector.load %arg7[%c0_13, %c0_14] : memref<1x64xf32, #tpu.memory_space<vmem>>, vector<1x64xf32>
    %14 = vector.broadcast %13 : vector<1x64xf32> to vector<8x64xf32>
    %15 = arith.addf %12, %14 : vector<8x64xf32>
    %c0_15 = arith.constant 0 : index
    %c0_16 = arith.constant 0 : index
    %16 = vector.load %arg8[%c0_15, %c0_16] : memref<64x8xf32, #tpu.memory_space<vmem>>, vector<64x8xf32>
    %cst_17 = arith.constant dense<0.000000e+00> : vector<8x8xf32>
    %17 = tpu.matmul %15, %16, %cst_17 {dimension_numbers = #tpu.dot_dimension_numbers<[1], [0], [0], [1], [0, 0, 1, 1], [], []>} : vector<8x64xf32>, vector<64x8xf32>, vector<8x8xf32> -> vector<8x8xf32>
    %c0_18 = arith.constant 0 : index
    %c0_19 = arith.constant 0 : index
    %18 = vector.load %arg9[%c0_18, %c0_19] : memref<1x8xf32, #tpu.memory_space<vmem>>, vector<1x8xf32>
    %19 = vector.broadcast %18 : vector<1x8xf32> to vector<8x8xf32>
    %20 = arith.addf %17, %19 : vector<8x8xf32>
    %c0_20 = arith.constant 0 : index
    %c0_21 = arith.constant 0 : index
    %21 = vector.load %arg10[%c0_20, %c0_21] : memref<8x8xf32, #tpu.memory_space<vmem>>, vector<8x8xf32>
    tpu.vector_store %arg10[%c0_20, %c0_21], %20 {strides = array<i32>} : memref<8x8xf32, #tpu.memory_space<vmem>>, vector<8x8xf32>,
    return
  }
  func.func @transform_0(%arg0: i32) -> (i32, i32) {
    %c0_i32 = arith.constant 0 : i32
    %c0_i32_0 = arith.constant 0 : i32
    return %arg0, %c0_i32 : i32, i32
  }
  func.func @transform_1(%arg0: i32) -> (i32, i32) {
    %c0_i32 = arith.constant 0 : i32
    %c0_i32_0 = arith.constant 0 : i32
    %c0_i32_1 = arith.constant 0 : i32
    return %c0_i32, %c0_i32_0 : i32, i32
  }
  func.func @transform_2(%arg0: i32) -> (i32, i32) {
    %c0_i32 = arith.constant 0 : i32
    %c0_i32_0 = arith.constant 0 : i32
    %c0_i32_1 = arith.constant 0 : i32
    return %c0_i32, %c0_i32_0 : i32, i32
  }
  func.func @transform_3(%arg0: i32) -> (i32, i32) {
    %c0_i32 = arith.constant 0 : i32
    %c0_i32_0 = arith.constant 0 : i32
    %c0_i32_1 = arith.constant 0 : i32
    return %c0_i32, %c0_i32_0 : i32, i32
  }
  func.func @transform_4(%arg0: i32) -> (i32, i32) {
    %c0_i32 = arith.constant 0 : i32
    %c0_i32_0 = arith.constant 0 : i32
    %c0_i32_1 = arith.constant 0 : i32
    return %c0_i32, %c0_i32_0 : i32, i32
  }
  func.func @transform_5(%arg0: i32) -> (i32, i32) {
    %c0_i32 = arith.constant 0 : i32
    %c0_i32_0 = arith.constant 0 : i32
    %c0_i32_1 = arith.constant 0 : i32
    return %c0_i32, %c0_i32_0 : i32, i32
  }
  func.func @transform_6(%arg0: i32) -> (i32, i32) {
    %c0_i32 = arith.constant 0 : i32
    %c0_i32_0 = arith.constant 0 : i32
    %c0_i32_1 = arith.constant 0 : i32
    return %c0_i32, %c0_i32_0 : i32, i32
  }
  func.func @transform_7(%arg0: i32) -> (i32, i32) {
    %c0_i32 = arith.constant 0 : i32
    %c0_i32_0 = arith.constant 0 : i32
    %c0_i32_1 = arith.constant 0 : i32
    return %c0_i32, %c0_i32_0 : i32, i32
  }
  func.func @transform_8(%arg0: i32) -> (i32, i32) {
    %c0_i32 = arith.constant 0 : i32
    %c0_i32_0 = arith.constant 0 : i32
    %c0_i32_1 = arith.constant 0 : i32
    return %c0_i32, %c0_i32_0 : i32, i32
  }
  func.func @transform_9(%arg0: i32) -> (i32, i32) {
    %c0_i32 = arith.constant 0 : i32
    %c0_i32_0 = arith.constant 0 : i32
    return %arg0, %c0_i32 : i32, i32
  }
}

</mosaic_0001>

<llo_original>
// kernel: mdn_forward_fused.1
$region0: #{mdn_forward_fused.1}
  #allocation0 [shape = 'u32[]', space=smem, size = 0x4, offset = 0x4, fixed_abs, tag = 'smem constant byte address 0x4 - core index']
  #allocation1 [shape = 'u32[144,128]{1,0:T(1,128)}', space=vmem, size = 0x12000, scoped, tag = 'internal scratch']
  %s0 = inlined_call_operand.vmem [shape: f32[16,64], index: 0, kind: input, shape index: {}]
  %s1 = inlined_call_operand.vmem [shape: f32[64,128], index: 1, kind: input, shape index: {}]
  %s2 = inlined_call_operand.vmem [shape: f32[1,128], index: 2, kind: input, shape index: {}]
  %s3 = inlined_call_operand.vmem [shape: f32[128,96], index: 3, kind: input, shape index: {}]
  %s4 = inlined_call_operand.vmem [shape: f32[1,96], index: 4, kind: input, shape index: {}]
  %s5 = inlined_call_operand.vmem [shape: f32[96,64], index: 5, kind: input, shape index: {}]
  %s6 = inlined_call_operand.vmem [shape: f32[1,64], index: 6, kind: input, shape index: {}]
  %s7 = inlined_call_operand.vmem [shape: f32[64,8], index: 7, kind: input, shape index: {}]
  %s8 = inlined_call_operand.vmem [shape: f32[1,8], index: 8, kind: input, shape index: {}]
  %s9 = inlined_call_operand.hbm [shape: f32[16,8], index: 9, kind: output, shape index: {}]
  %s10 = sld [smem:[#allocation0]]
  $region69: #{mdn_forward_fused.1} parent=0
    _
  %s12 = ssub.s32 1, %s10
  %s13 = scalar_select 0, %s12, %s10
  $region1: #{mdn_forward_fused.1} parent=0
    #allocation2 [shape = 'u8[8192]{0}', space=vmem, size = 0x2000, scoped, tag = 'output window, operand 0']
    #allocation3 [shape = 's32[2]{0}', space=sflag, size = 0x8, scoped, tag = 'scoped memory for mdn_forward_fused.1']
    %14 = vsyncpa [#allocation3], 0
    %s15 = scalar_lea.sflag [#allocation3], 1
    %16 = vsyncpa %s15, 0
    loop: start=0, step=1, limit=4
    $region2: #{mdn_forward_fused.1} parent=1 // loop_pre_header
      _
    $region3: #{mdn_forward_fused.1} parent=1 // loop_header
      %s18 = sphi 0, %s22
      %p19 = scmp.ge.s32.totalorder %s18, 4
      %s28 = sphi 0, %s30
      %s31 = sphi 0, %s28
      %s32 = sphi 0, %s31
      %s48 = sphi 0, %s32
      %s52 = sphi 0, %s52
      %s54 = sphi 0, %s52
      %s55 = sphi 0, %s54
      %s69 = sphi 0, %s55
      %s73 = sphi 0, %s73
      %s75 = sphi 0, %s73
      %s76 = sphi 0, %s75
      %s90 = sphi 0, %s76
      %s94 = sphi 0, %s94
      %s96 = sphi 0, %s94
      %s97 = sphi 0, %s96
      %s111 = sphi 0, %s97
      %s115 = sphi 0, %s115
      %s117 = sphi 0, %s115
      %s118 = sphi 0, %s117
      %s132 = sphi 0, %s118
      %s136 = sphi 0, %s136
      %s138 = sphi 0, %s136
      %s139 = sphi 0, %s138
      %s153 = sphi 0, %s139
      %s157 = sphi 0, %s157
      %s159 = sphi 0, %s157
      %s160 = sphi 0, %s159
      %s174 = sphi 0, %s160
      %s178 = sphi 0, %s178
      %s180 = sphi 0, %s178
      %s181 = sphi 0, %s180
      %s195 = sphi 0, %s181
      %s199 = sphi 0, %s199
      %s201 = sphi 0, %s199
      %s202 = sphi 0, %s201
      %s216 = sphi 0, %s202
      %s222 = sphi 0, %s224
      %s225 = sphi 0, %s222
      %s226 = sphi 0, %s225
      %s242 = sphi 0, %s226
    $region4: #{mdn_forward_fused.1} parent=1 // loop_header_branch
      %21 = sbr.rel (%p19) target = $region8
    $region5: #{mdn_forward_fused.1} parent=1 // loop_body
      %s23 = ssub.s32 %s18, 1
      %s24 = ssub.s32 %s18, 2
      %s25 = sadd.s32 %s18, 1
      %s26 = ssub.s32 %s18, %s25
      %p27 = scmp.eq.s32.totalorder %s26, 0
      %s29 = sadd.s32 %s28, 1
      %s30 = scalar_select %p27, %s28, %s29
      %p33 = pneg %p27
      %p34 = scmp.eq.s32.totalorder %s18, 1
      %p35 = por %p33, %p34
      %p36 = scmp.ne.s32.totalorder %s28, %s31
      %p37 = scmp.eq.s32.totalorder %s18, 0
      %p38 = por %p36, %p37
      %p39 = scmp.ne.s32.totalorder %s28, %s31
      %p40 = scmp.eq.s32.totalorder %s23, 1
      %p41 = por %p39, %p40
      %p42 = scmp.ne.s32.totalorder %s31, %s32
      %p43 = scmp.eq.s32.totalorder %s23, 0
      %p44 = por %p42, %p43
      %p45 = scmp.ne.s32.totalorder %s31, %s32
      %p46 = scmp.eq.s32.totalorder %s24, 1
      %p47 = por %p45, %p46
      %p49 = scmp.ne.s32.totalorder %s32, %s48
      %p50 = scmp.eq.s32.totalorder %s24, 0
      %p51 = por %p49, %p50
      %s53 = sadd.s32 %s52, 1
      %p56 = scmp.eq.s32.totalorder %s18, 1
      %p57 = scmp.ne.s32.totalorder %s52, %s54
      %p58 = scmp.eq.s32.totalorder %s18, 0
      %p59 = por %p57, %p58
      %p60 = scmp.ne.s32.totalorder %s52, %s54
      %p61 = scmp.eq.s32.totalorder %s23, 1
      %p62 = por %p60, %p61
      %p63 = scmp.ne.s32.totalorder %s54, %s55
      %p64 = scmp.eq.s32.totalorder %s23, 0
      %p65 = por %p63, %p64
      %p66 = scmp.ne.s32.totalorder %s54, %s55
      %p67 = scmp.eq.s32.totalorder %s24, 1
      %p68 = por %p66, %p67
      %p70 = scmp.ne.s32.totalorder %s55, %s69
      %p71 = scmp.eq.s32.totalorder %s24, 0
      %p72 = por %p70, %p71
      %s74 = sadd.s32 %s73, 1
      %p77 = scmp.eq.s32.totalorder %s18, 1
      %p78 = scmp.ne.s32.totalorder %s73, %s75
      %p79 = scmp.eq.s32.totalorder %s18, 0
      %p80 = por %p78, %p79
      %p81 = scmp.ne.s32.totalorder %s73, %s75
      %p82 = scmp.eq.s32.totalorder %s23, 1
      %p83 = por %p81, %p82
      %p84 = scmp.ne.s32.totalorder %s75, %s76
      %p85 = scmp.eq.s32.totalorder %s23, 0
      %p86 = por %p84, %p85
      %p87 = scmp.ne.s32.totalorder %s75, %s76
      %p88 = scmp.eq.s32.totalorder %s24, 1
      %p89 = por %p87, %p88
      %p91 = scmp.ne.s32.totalorder %s76, %s90
      %p92 = scmp.eq.s32.totalorder %s24, 0
      %p93 = por %p91, %p92
      %s95 = sadd.s32 %s94, 1
      %p98 = scmp.eq.s32.totalorder %s18, 1
      %p99 = scmp.ne.s32.totalorder %s94, %s96
      %p100 = scmp.eq.s32.totalorder %s18, 0
      %p101 = por %p99, %p100
      %p102 = scmp.ne.s32.totalorder %s94, %s96
      %p103 = scmp.eq.s32.totalorder %s23, 1
      %p104 = por %p102, %p103
      %p105 = scmp.ne.s32.totalorder %s96, %s97
      %p106 = scmp.eq.s32.totalorder %s23, 0
      %p107 = por %p105, %p106
      %p108 = scmp.ne.s32.totalorder %s96, %s97
      %p109 = scmp.eq.s32.totalorder %s24, 1
      %p110 = por %p108, %p109
      %p112 = scmp.ne.s32.totalorder %s97, %s111
      %p113 = scmp.eq.s32.totalorder %s24, 0
      %p114 = por %p112, %p113
      %s116 = sadd.s32 %s115, 1
      %p119 = scmp.eq.s32.totalorder %s18, 1
      %p120 = scmp.ne.s32.totalorder %s115, %s117
      %p121 = scmp.eq.s32.totalorder %s18, 0
      %p122 = por %p120, %p121
      %p123 = scmp.ne.s32.totalorder %s115, %s117
      %p124 = scmp.eq.s32.totalorder %s23, 1
      %p125 = por %p123, %p124
      %p126 = scmp.ne.s32.totalorder %s117, %s118
      %p127 = scmp.eq.s32.totalorder %s23, 0
      %p128 = por %p126, %p127
      %p129 = scmp.ne.s32.totalorder %s117, %s118
      %p130 = scmp.eq.s32.totalorder %s24, 1
      %p131 = por %p129, %p130
      %p133 = scmp.ne.s32.totalorder %s118, %s132
      %p134 = scmp.eq.s32.totalorder %s24, 0
      %p135 = por %p133, %p134
      %s137 = sadd.s32 %s136, 1
      %p140 = scmp.eq.s32.totalorder %s18, 1
      %p141 = scmp.ne.s32.totalorder %s136, %s138
      %p142 = scmp.eq.s32.totalorder %s18, 0
      %p143 = por %p141, %p142
      %p144 = scmp.ne.s32.totalorder %s136, %s138
      %p145 = scmp.eq.s32.totalorder %s23, 1
      %p146 = por %p144, %p145
      %p147 = scmp.ne.s32.totalorder %s138, %s139
      %p148 = scmp.eq.s32.totalorder %s23, 0
      %p149 = por %p147, %p148
      %p150 = scmp.ne.s32.totalorder %s138, %s139
      %p151 = scmp.eq.s32.totalorder %s24, 1
      %p152 = por %p150, %p151
      %p154 = scmp.ne.s32.totalorder %s139, %s153
      %p155 = scmp.eq.s32.totalorder %s24, 0
      %p156 = por %p154, %p155
      %s158 = sadd.s32 %s157, 1
      %p161 = scmp.eq.s32.totalorder %s18, 1
      %p162 = scmp.ne.s32.totalorder %s157, %s159
      %p163 = scmp.eq.s32.totalorder %s18, 0
      %p164 = por %p162, %p163
      %p165 = scmp.ne.s32.totalorder %s157, %s159
      %p166 = scmp.eq.s32.totalorder %s23, 1
      %p167 = por %p165, %p166
      %p168 = scmp.ne.s32.totalorder %s159, %s160
      %p169 = scmp.eq.s32.totalorder %s23, 0
      %p170 = por %p168, %p169
      %p171 = scmp.ne.s32.totalorder %s159, %s160
      %p172 = scmp.eq.s32.totalorder %s24, 1
      %p173 = por %p171, %p172
      %p175 = scmp.ne.s32.totalorder %s160, %s174
      %p176 = scmp.eq.s32.totalorder %s24, 0
      %p177 = por %p175, %p176
      %s179 = sadd.s32 %s178, 1
      %p182 = scmp.eq.s32.totalorder %s18, 1
      %p183 = scmp.ne.s32.totalorder %s178, %s180
      %p184 = scmp.eq.s32.totalorder %s18, 0
      %p185 = por %p183, %p184
      %p186 = scmp.ne.s32.totalorder %s178, %s180
      %p187 = scmp.eq.s32.totalorder %s23, 1
      %p188 = por %p186, %p187
      %p189 = scmp.ne.s32.totalorder %s180, %s181
      %p190 = scmp.eq.s32.totalorder %s23, 0
      %p191 = por %p189, %p190
      %p192 = scmp.ne.s32.totalorder %s180, %s181
      %p193 = scmp.eq.s32.totalorder %s24, 1
      %p194 = por %p192, %p193
      %p196 = scmp.ne.s32.totalorder %s181, %s195
      %p197 = scmp.eq.s32.totalorder %s24, 0
      %p198 = por %p196, %p197
      %s200 = sadd.s32 %s199, 1
      %p203 = scmp.eq.s32.totalorder %s18, 1
      %p204 = scmp.ne.s32.totalorder %s199, %s201
      %p205 = scmp.eq.s32.totalorder %s18, 0
      %p206 = por %p204, %p205
      %p207 = scmp.ne.s32.totalorder %s199, %s201
      %p208 = scmp.eq.s32.totalorder %s23, 1
      %p209 = por %p207, %p208
      %p210 = scmp.ne.s32.totalorder %s201, %s202
      %p211 = scmp.eq.s32.totalorder %s23, 0
      %p212 = por %p210, %p211
      %p213 = scmp.ne.s32.totalorder %s201, %s202
      %p214 = scmp.eq.s32.totalorder %s24, 1
      %p215 = por %p213, %p214
      %p217 = scmp.ne.s32.totalorder %s202, %s216
      %p218 = scmp.eq.s32.totalorder %s24, 0
      %p219 = por %p217, %p218
      %s220 = ssub.s32 %s18, %s25
      %p221 = scmp.eq.s32.totalorder %s220, 0
      %s223 = sadd.s32 %s222, 1
      %s224 = scalar_select %p221, %s222, %s223
      %p227 = pneg %p221
      %p228 = scmp.eq.s32.totalorder %s18, 1
      %p229 = por %p227, %p228
      %p230 = scmp.ne.s32.totalorder %s222, %s225
      %p231 = scmp.eq.s32.totalorder %s18, 0
      %p232 = por %p230, %p231
      %p233 = scmp.ne.s32.totalorder %s222, %s225
      %p234 = scmp.eq.s32.totalorder %s23, 1
      %p235 = por %p233, %p234
      %p236 = scmp.ne.s32.totalorder %s225, %s226
      %p237 = scmp.eq.s32.totalorder %s23, 0
      %p238 = por %p236, %p237
      %p239 = scmp.ne.s32.totalorder %s225, %s226
      %p240 = scmp.eq.s32.totalorder %s24, 1
      %p241 = por %p239, %p240
      %p243 = scmp.ne.s32.totalorder %s226, %s242
      %p244 = scmp.eq.s32.totalorder %s24, 0
      %p245 = por %p243, %p244
      %p246 = scmp.le.s32.totalorder 1, %s18
      %p247 = scmp.lt.s32.totalorder %s18, 3
      %p248 = pnand %p246, %p247
      %p249 = pneg %p248
      // Predicated region
      $region9: #{mdn_forward_fused.1} parent=5 // pred_check
        _
      $region10: #{mdn_forward_fused.1} parent=5 // pred_check_branch
        %251 = sbr.rel (%p248) target = $region12
      $region11: #{mdn_forward_fused.1} parent=5 // pred_region
        %s252 = ssub.s32 %s18, 1
        // Predicated region
        $region13: #{mdn_forward_fused.1} parent=11 // pred_check
          %p253 = pneg %p65
        $region14: #{mdn_forward_fused.1} parent=11 // pred_check_branch
          %255 = sbr.rel (%p253) target = $region16
        $region15: #{mdn_forward_fused.1} parent=11 // pred_region
          _
        $region16: #{mdn_forward_fused.1} parent=11 // pred_fallthru
          _
        // Predicated region
        $region17: #{mdn_forward_fused.1} parent=11 // pred_check
          %p256 = pneg %p86
        $region18: #{mdn_forward_fused.1} parent=11 // pred_check_branch
          %258 = sbr.rel (%p256) target = $region20
        $region19: #{mdn_forward_fused.1} parent=11 // pred_region
          _
        $region20: #{mdn_forward_fused.1} parent=11 // pred_fallthru
          _
        // Predicated region
        $region21: #{mdn_forward_fused.1} parent=11 // pred_check
          %p259 = pneg %p107
        $region22: #{mdn_forward_fused.1} parent=11 // pred_check_branch
          %261 = sbr.rel (%p259) target = $region24
        $region23: #{mdn_forward_fused.1} parent=11 // pred_region
          _
        $region24: #{mdn_forward_fused.1} parent=11 // pred_fallthru
          _
        // Predicated region
        $region25: #{mdn_forward_fused.1} parent=11 // pred_check
          %p262 = pneg %p128
        $region26: #{mdn_forward_fused.1} parent=11 // pred_check_branch
          %264 = sbr.rel (%p262) target = $region28
        $region27: #{mdn_forward_fused.1} parent=11 // pred_region
          _
        $region28: #{mdn_forward_fused.1} parent=11 // pred_fallthru
          _
        // Predicated region
        $region29: #{mdn_forward_fused.1} parent=11 // pred_check
          %p265 = pneg %p149
        $region30: #{mdn_forward_fused.1} parent=11 // pred_check_branch
          %267 = sbr.rel (%p265) target = $region32
        $region31: #{mdn_forward_fused.1} parent=11 // pred_region
          _
        $region32: #{mdn_forward_fused.1} parent=11 // pred_fallthru
          _
        // Predicated region
        $region33: #{mdn_forward_fused.1} parent=11 // pred_check
          %p268 = pneg %p170
        $region34: #{mdn_forward_fused.1} parent=11 // pred_check_branch
          %270 = sbr.rel (%p268) target = $region36
        $region35: #{mdn_forward_fused.1} parent=11 // pred_region
          _
        $region36: #{mdn_forward_fused.1} parent=11 // pred_fallthru
          _
        // Predicated region
        $region37: #{mdn_forward_fused.1} parent=11 // pred_check
          %p271 = pneg %p191
        $region38: #{mdn_forward_fused.1} parent=11 // pred_check_branch
          %273 = sbr.rel (%p271) target = $region40
        $region39: #{mdn_forward_fused.1} parent=11 // pred_region
          _
        $region40: #{mdn_forward_fused.1} parent=11 // pred_fallthru
          _
        // Predicated region
        $region41: #{mdn_forward_fused.1} parent=11 // pred_check
          %p274 = pneg %p212
        $region42: #{mdn_forward_fused.1} parent=11 // pred_check_branch
          %276 = sbr.rel (%p274) target = $region44
        $region43: #{mdn_forward_fused.1} parent=11 // pred_region
          _
        $region44: #{mdn_forward_fused.1} parent=11 // pred_fallthru
          _
      $region12: #{mdn_forward_fused.1} parent=5 // pred_fallthru
        _
      %p277 = scmp.lt.s32.totalorder %s18, 2
      // Predicated region
      $region45: #{mdn_forward_fused.1} parent=5 // pred_check
        %p278 = pneg %p277
      $region46: #{mdn_forward_fused.1} parent=5 // pred_check_branch
        %280 = sbr.rel (%p278) target = $region48
      $region47: #{mdn_forward_fused.1} parent=5 // pred_region
        // Predicated region
        $region49: #{mdn_forward_fused.1} parent=47 // pred_check
          %p281 = pneg %p38
        $region50: #{mdn_forward_fused.1} parent=47 // pred_check_branch
          %283 = sbr.rel (%p281) target = $region52
        $region51: #{mdn_forward_fused.1} parent=47 // pred_region
          %p284 = scmp.lt.s32.totalorder %s18, 1
          %s285 = scalar_select %p284, %s18, 1
          %s286 = smul.addr %s285, 8
          %s287 = scalar_lea.vmem %s0, %s286
        $region52: #{mdn_forward_fused.1} parent=47 // pred_fallthru
          _
      $region48: #{mdn_forward_fused.1} parent=5 // pred_fallthru
        _
      %p288 = scmp.le.s32.totalorder 1, %s18
      %p289 = scmp.lt.s32.totalorder %s18, 3
      %p290 = pnand %p288, %p289
      %p291 = pneg %p290
      // Predicated region
      $region53: #{mdn_forward_fused.1} parent=5 // pred_check
        _
      $region54: #{mdn_forward_fused.1} parent=5 // pred_check_branch
        %293 = sbr.rel (%p290) target = $region56
      $region55: #{mdn_forward_fused.1} parent=5 // pred_region
        %s294 = ssub.s32 %s18, 1
        %p295 = scmp.lt.s32.totalorder %s23, 1
        %s296 = scalar_select %p295, %s23, 1
        %s297 = smul.addr %s296, 8
        %s298 = scalar_lea.vmem %s0, %s297
        %p299 = pneg %p44
        %p300 = pneg %p41
        %p301 = pneg %p65
        %p302 = pneg %p62
        %p303 = pneg %p86
        %p304 = pneg %p83
        %p305 = pneg %p107
        %p306 = pneg %p104
        %p307 = pneg %p128
        %p308 = pneg %p125
        %p309 = pneg %p149
        %p310 = pneg %p146
        %p311 = pneg %p170
        %p312 = pneg %p167
        %p313 = pneg %p191
        %p314 = pneg %p188
        %p315 = pneg %p212
        %p316 = pneg %p209
        %p317 = pneg %p238
        %p318 = pneg %p235
        %s319 = sand.u32 %s225, 1
        %s320 = scalar_lea.sflag [#allocation3], %s319
        %s321 = sand.u32 %s225, 1
        %s322 = smul.addr %s321, 8
        %s323 = scalar_lea.vmem [#allocation2], %s322
        %p324 = scmp.lt.s32.totalorder %s23, 1
        %s325 = scalar_select %p324, %s23, 1
        %s326 = smul.addr %s325, 8
        %s327 = scalar_lea.vmem %s0, %s326
        %v328 = vld [vmem:[%s327] sm:$0xff]
        %v329 = vld [vmem:[%s1] sm:$0xff]
        %v330 = vld [vmem:[%s1 + $0x8] sm:$0xff]
        %v331 = vld [vmem:[%s1 + $0x10] sm:$0xff]
        %v332 = vld [vmem:[%s1 + $0x18] sm:$0xff]
        %v333 = vld [vmem:[%s1 + $0x20] sm:$0xff]
        %v334 = vld [vmem:[%s1 + $0x28] sm:$0xff]
        %v335 = vld [vmem:[%s1 + $0x30] sm:$0xff]
        %v336 = vld [vmem:[%s1 + $0x38] sm:$0xff]
        %v337 = vld [vmem:[%s2] sm:$0x1]
        %v339 = vlaneseq
        %v340 = vshrl.u32 %v339, 7
        %v341 = vsub.s32 0, %v340
        %v342 = vrot.slane %v337, %v341
        %vm344 = vcmask 523264
        %v346 = vsel %vm344, %v328, 0
        %348 = vmatprep.subr.mxu0 0.0
        %349 = vmatpush1.msra.mxu0 %v329
        %350 = vmatprep.subr.mxu0 0.0
        %351 = vmatpush1.msra.mxu0 %v330
        %352 = vmatprep.subr.mxu0 0.0
        %353 = vmatpush1.msra.mxu0 %v331
        %354 = vmatprep.subr.mxu0 0.0
        %355 = vmatpush1.msra.mxu0 %v332
        %356 = vmatprep.subr.mxu0 0.0
        %357 = vmatpush1.msra.mxu0 %v333
        %358 = vmatprep.subr.mxu0 0.0
        %359 = vmatpush1.msra.mxu0 %v334
        %360 = vmatprep.subr.mxu0 0.0
        %361 = vmatpush1.msra.mxu0 %v335
        %362 = vmatprep.subr.mxu0 0.0
        %363 = vmatpush1.msra.mxu0 %v336
        %364 = vmatprep.subr.mxu0 0.0
        %365 = vmatpush1.msra.mxu0 0.0
        %366 = vmatprep.subr.mxu0 0.0
        %367 = vmatpush1.msra.mxu0 0.0
        %368 = vmatprep.subr.mxu0 0.0
        %369 = vmatpush1.msra.mxu0 0.0
        %370 = vmatprep.subr.mxu0 0.0
        %371 = vmatpush1.msra.mxu0 0.0
        %372 = vmatprep.subr.mxu0 0.0
        %373 = vmatpush1.msra.mxu0 0.0
        %374 = vmatprep.subr.mxu0 0.0
        %375 = vmatpush1.msra.mxu0 0.0
        %376 = vmatprep.subr.mxu0 0.0
        %377 = vmatpush1.msra.mxu0 0.0
        %378 = vmatprep.subr.mxu0 0.0
        %379 = vmatpush1.msra.mxu0 0.0
        %380 = vmatprep.subr.mxu0 0.0
        %381 = vmatpush1.msra.mxu0 0.0
        %382 = vmatprep.subr.mxu0 0.0
        %383 = vmatpush1.msra.mxu0 0.0
        %384 = vmatprep.subr.mxu0 0.0
        %385 = vmatpush1.msra.mxu0 0.0
        %386 = vmatprep.subr.mxu0 0.0
        %387 = vmatpush1.msra.mxu0 0.0
        %388 = vmatprep.subr.mxu0 0.0
        %389 = vmatpush1.msra.mxu0 0.0
        %390 = vmatprep.subr.mxu0 0.0
        %391 = vmatpush1.msra.mxu0 0.0
        %392 = vmatprep.subr.mxu0 0.0
        %393 = vmatpush1.msra.mxu0 0.0
        %394 = vmatprep.subr.mxu0 0.0
        %395 = vmatpush1.msra.mxu0 0.0
        %396 = vmatprep.subr.mxu0 0.0
        %397 = vmatpush1.msra.mxu0 0.0
        %398 = vmatprep.subr.mxu0 0.0
        %399 = vmatpush1.msra.mxu0 0.0
        %400 = vmatprep.subr.mxu0 0.0
        %401 = vmatpush1.msra.mxu0 0.0
        %402 = vmatprep.subr.mxu0 0.0
        %403 = vmatpush1.msra.mxu0 0.0
        %404 = vmatprep.subr.mxu0 0.0
        %405 = vmatpush1.msra.mxu0 0.0
        %406 = vmatprep.subr.mxu0 0.0
        %407 = vmatpush1.msra.mxu0 0.0
        %408 = vmatprep.subr.mxu0 0.0
        %409 = vmatpush1.msra.mxu0 0.0
        %410 = vmatprep.subr.mxu0 0.0
        %411 = vmatpush1.msra.mxu0 0.0
        %412 = vmatprep.mubr.f32.mxu0 0.0
        %413 = vmatmul.mubr.f32.gmra.mrb[0].mxu0 %v346
        %v414 = vpop.f32.mrb[0].mxu0
        %v415 = vadd.f32 %v342, %v414
        %v416 = vpop.f32.mrb[0].mxu0
        %417 = vdwg.mxu0
        %v418 = vld [vmem:[%s3] sm:$0xff]
        %v419 = vld [vmem:[%s3 + $0x8] sm:$0xff]
        %v420 = vld [vmem:[%s3 + $0x10] sm:$0xff]
        %v421 = vld [vmem:[%s3 + $0x18] sm:$0xff]
        %v422 = vld [vmem:[%s3 + $0x20] sm:$0xff]
        %v423 = vld [vmem:[%s3 + $0x28] sm:$0xff]
        %v424 = vld [vmem:[%s3 + $0x30] sm:$0xff]
        %v425 = vld [vmem:[%s3 + $0x38] sm:$0xff]
        %v426 = vld [vmem:[%s3 + $0x40] sm:$0xff]
        %v427 = vld [vmem:[%s3 + $0x48] sm:$0xff]
        %v428 = vld [vmem:[%s3 + $0x50] sm:$0xff]
        %v429 = vld [vmem:[%s3 + $0x58] sm:$0xff]
        %v430 = vld [vmem:[%s3 + $0x60] sm:$0xff]
        %v431 = vld [vmem:[%s3 + $0x68] sm:$0xff]
        %v432 = vld [vmem:[%s3 + $0x70] sm:$0xff]
        %v433 = vld [vmem:[%s3 + $0x78] sm:$0xff]
        %v434 = vld [vmem:[%s4] sm:$0x1]
        %v436 = vlaneseq
        %v437 = vshrl.u32 %v436, 7
        %v438 = vsub.s32 0, %v437
        %v439 = vrot.slane %v434, %v438
        %441 = vmatprep.subr.mxu0 0.0
        %442 = vmatpush1.msra.mxu0 %v418
        %443 = vmatprep.subr.mxu0 0.0
        %444 = vmatpush1.msra.mxu0 %v419
        %445 = vmatprep.subr.mxu0 0.0
        %446 = vmatpush1.msra.mxu0 %v420
        %447 = vmatprep.subr.mxu0 0.0
        %448 = vmatpush1.msra.mxu0 %v421
        %449 = vmatprep.subr.mxu0 0.0
        %450 = vmatpush1.msra.mxu0 %v422
        %451 = vmatprep.subr.mxu0 0.0
        %452 = vmatpush1.msra.mxu0 %v423
        %453 = vmatprep.subr.mxu0 0.0
        %454 = vmatpush1.msra.mxu0 %v424
        %455 = vmatprep.subr.mxu0 0.0
        %456 = vmatpush1.msra.mxu0 %v425
        %457 = vmatprep.subr.mxu0 0.0
        %458 = vmatpush1.msra.mxu0 %v426
        %459 = vmatprep.subr.mxu0 0.0
        %460 = vmatpush1.msra.mxu0 %v427
        %461 = vmatprep.subr.mxu0 0.0
        %462 = vmatpush1.msra.mxu0 %v428
        %463 = vmatprep.subr.mxu0 0.0
        %464 = vmatpush1.msra.mxu0 %v429
        %465 = vmatprep.subr.mxu0 0.0
        %466 = vmatpush1.msra.mxu0 %v430
        %467 = vmatprep.subr.mxu0 0.0
        %468 = vmatpush1.msra.mxu0 %v431
        %469 = vmatprep.subr.mxu0 0.0
        %470 = vmatpush1.msra.mxu0 %v432
        %471 = vmatprep.subr.mxu0 0.0
        %472 = vmatpush1.msra.mxu0 %v433
        %473 = vmatprep.subr.mxu0 0.0
        %474 = vmatpush1.msra.mxu0 0.0
        %475 = vmatprep.subr.mxu0 0.0
        %476 = vmatpush1.msra.mxu0 0.0
        %477 = vmatprep.subr.mxu0 0.0
        %478 = vmatpush1.msra.mxu0 0.0
        %479 = vmatprep.subr.mxu0 0.0
        %480 = vmatpush1.msra.mxu0 0.0
        %481 = vmatprep.subr.mxu0 0.0
        %482 = vmatpush1.msra.mxu0 0.0
        %483 = vmatprep.subr.mxu0 0.0
        %484 = vmatpush1.msra.mxu0 0.0
        %485 = vmatprep.subr.mxu0 0.0
        %486 = vmatpush1.msra.mxu0 0.0
        %487 = vmatprep.subr.mxu0 0.0
        %488 = vmatpush1.msra.mxu0 0.0
        %489 = vmatprep.subr.mxu0 0.0
        %490 = vmatpush1.msra.mxu0 0.0
        %491 = vmatprep.subr.mxu0 0.0
        %492 = vmatpush1.msra.mxu0 0.0
        %493 = vmatprep.subr.mxu0 0.0
        %494 = vmatpush1.msra.mxu0 0.0
        %495 = vmatprep.subr.mxu0 0.0
        %496 = vmatpush1.msra.mxu0 0.0
        %497 = vmatprep.subr.mxu0 0.0
        %498 = vmatpush1.msra.mxu0 0.0
        %499 = vmatprep.subr.mxu0 0.0
        %500 = vmatpush1.msra.mxu0 0.0
        %501 = vmatprep.subr.mxu0 0.0
        %502 = vmatpush1.msra.mxu0 0.0
        %503 = vmatprep.subr.mxu0 0.0
        %504 = vmatpush1.msra.mxu0 0.0
        %505 = vmatprep.mubr.f32.mxu0 0.0
        %506 = vmatmul.mubr.f32.gmra.mrb[0].mxu0 %v415
        %v507 = vpop.f32.mrb[0].mxu0
        %v508 = vadd.f32 %v439, %v507
        %v509 = vpop.f32.mrb[0].mxu0
        %510 = vdwg.mxu0
        %v511 = vld [vmem:[%s5] sm:$0xff]
        %v512 = vld [vmem:[%s5 + $0x8] sm:$0xff]
        %v513 = vld [vmem:[%s5 + $0x10] sm:$0xff]
        %v514 = vld [vmem:[%s5 + $0x18] sm:$0xff]
        %v515 = vld [vmem:[%s5 + $0x20] sm:$0xff]
        %v516 = vld [vmem:[%s5 + $0x28] sm:$0xff]
        %v517 = vld [vmem:[%s5 + $0x30] sm:$0xff]
        %v518 = vld [vmem:[%s5 + $0x38] sm:$0xff]
        %v519 = vld [vmem:[%s5 + $0x40] sm:$0xff]
        %v520 = vld [vmem:[%s5 + $0x48] sm:$0xff]
        %v521 = vld [vmem:[%s5 + $0x50] sm:$0xff]
        %v522 = vld [vmem:[%s5 + $0x58] sm:$0xff]
        %v523 = vld [vmem:[%s6] sm:$0x1]
        %v525 = vlaneseq
        %v526 = vshrl.u32 %v525, 7
        %v527 = vsub.s32 0, %v526
        %v528 = vrot.slane %v523, %v527
        %vm530 = vcmask 785408
        %v532 = vsel %vm530, %v508, 0
        %534 = vmatprep.subr.mxu0 0.0
        %535 = vmatpush1.msra.mxu0 %v511
        %536 = vmatprep.subr.mxu0 0.0
        %537 = vmatpush1.msra.mxu0 %v512
        %538 = vmatprep.subr.mxu0 0.0
        %539 = vmatpush1.msra.mxu0 %v513
        %540 = vmatprep.subr.mxu0 0.0
        %541 = vmatpush1.msra.mxu0 %v514
        %542 = vmatprep.subr.mxu0 0.0
        %543 = vmatpush1.msra.mxu0 %v515
        %544 = vmatprep.subr.mxu0 0.0
        %545 = vmatpush1.msra.mxu0 %v516
        %546 = vmatprep.subr.mxu0 0.0
        %547 = vmatpush1.msra.mxu0 %v517
        %548 = vmatprep.subr.mxu0 0.0
        %549 = vmatpush1.msra.mxu0 %v518
        %550 = vmatprep.subr.mxu0 0.0
        %551 = vmatpush1.msra.mxu0 %v519
        %552 = vmatprep.subr.mxu0 0.0
        %553 = vmatpush1.msra.mxu0 %v520
        %554 = vmatprep.subr.mxu0 0.0
        %555 = vmatpush1.msra.mxu0 %v521
        %556 = vmatprep.subr.mxu0 0.0
        %557 = vmatpush1.msra.mxu0 %v522
        %558 = vmatprep.subr.mxu0 0.0
        %559 = vmatpush1.msra.mxu0 0.0
        %560 = vmatprep.subr.mxu0 0.0
        %561 = vmatpush1.msra.mxu0 0.0
        %562 = vmatprep.subr.mxu0 0.0
        %563 = vmatpush1.msra.mxu0 0.0
        %564 = vmatprep.subr.mxu0 0.0
        %565 = vmatpush1.msra.mxu0 0.0
        %566 = vmatprep.subr.mxu0 0.0
        %567 = vmatpush1.msra.mxu0 0.0
        %568 = vmatprep.subr.mxu0 0.0
        %569 = vmatpush1.msra.mxu0 0.0
        %570 = vmatprep.subr.mxu0 0.0
        %571 = vmatpush1.msra.mxu0 0.0
        %572 = vmatprep.subr.mxu0 0.0
        %573 = vmatpush1.msra.mxu0 0.0
        %574 = vmatprep.subr.mxu0 0.0
        %575 = vmatpush1.msra.mxu0 0.0
        %576 = vmatprep.subr.mxu0 0.0
        %577 = vmatpush1.msra.mxu0 0.0
        %578 = vmatprep.subr.mxu0 0.0
        %579 = vmatpush1.msra.mxu0 0.0
        %580 = vmatprep.subr.mxu0 0.0
        %581 = vmatpush1.msra.mxu0 0.0
        %582 = vmatprep.subr.mxu0 0.0
        %583 = vmatpush1.msra.mxu0 0.0
        %584 = vmatprep.subr.mxu0 0.0
        %585 = vmatpush1.msra.mxu0 0.0
        %586 = vmatprep.subr.mxu0 0.0
        %587 = vmatpush1.msra.mxu0 0.0
        %588 = vmatprep.subr.mxu0 0.0
        %589 = vmatpush1.msra.mxu0 0.0
        %590 = vmatprep.subr.mxu0 0.0
        %591 = vmatpush1.msra.mxu0 0.0
        %592 = vmatprep.subr.mxu0 0.0
        %593 = vmatpush1.msra.mxu0 0.0
        %594 = vmatprep.subr.mxu0 0.0
        %595 = vmatpush1.msra.mxu0 0.0
        %596 = vmatprep.subr.mxu0 0.0
        %597 = vmatpush1.msra.mxu0 0.0
        %598 = vmatprep.mubr.f32.mxu0 0.0
        %599 = vmatmul.mubr.f32.gmra.mrb[0].mxu0 %v532
        %v600 = vpop.f32.mrb[0].mxu0
        %v601 = vadd.f32 %v528, %v600
        %v602 = vpop.f32.mrb[0].mxu0
        %603 = vdwg.mxu0
        %v604 = vld [vmem:[%s7] sm:$0xff]
        %v605 = vld [vmem:[%s7 + $0x8] sm:$0xff]
        %v606 = vld [vmem:[%s7 + $0x10] sm:$0xff]
        %v607 = vld [vmem:[%s7 + $0x18] sm:$0xff]
        %v608 = vld [vmem:[%s7 + $0x20] sm:$0xff]
        %v609 = vld [vmem:[%s7 + $0x28] sm:$0xff]
        %v610 = vld [vmem:[%s7 + $0x30] sm:$0xff]
        %v611 = vld [vmem:[%s7 + $0x38] sm:$0xff]
        %v612 = vld [vmem:[%s8] sm:$0x1]
        %v614 = vlaneseq
        %v615 = vshrl.u32 %v614, 7
        %v616 = vsub.s32 0, %v615
        %v617 = vrot.slane %v612, %v616
        %v620 = vsel %vm344, %v601, 0
        %622 = vmatprep.subr.mxu0 0.0
        %623 = vmatpush1.msra.mxu0 %v604
        %624 = vmatprep.subr.mxu0 0.0
        %625 = vmatpush1.msra.mxu0 %v605
        %626 = vmatprep.subr.mxu0 0.0
        %627 = vmatpush1.msra.mxu0 %v606
        %628 = vmatprep.subr.mxu0 0.0
        %629 = vmatpush1.msra.mxu0 %v607
        %630 = vmatprep.subr.mxu0 0.0
        %631 = vmatpush1.msra.mxu0 %v608
        %632 = vmatprep.subr.mxu0 0.0
        %633 = vmatpush1.msra.mxu0 %v609
        %634 = vmatprep.subr.mxu0 0.0
        %635 = vmatpush1.msra.mxu0 %v610
        %636 = vmatprep.subr.mxu0 0.0
        %637 = vmatpush1.msra.mxu0 %v611
        %638 = vmatprep.subr.mxu0 0.0
        %639 = vmatpush1.msra.mxu0 0.0
        %640 = vmatprep.subr.mxu0 0.0
        %641 = vmatpush1.msra.mxu0 0.0
        %642 = vmatprep.subr.mxu0 0.0
        %643 = vmatpush1.msra.mxu0 0.0
        %644 = vmatprep.subr.mxu0 0.0
        %645 = vmatpush1.msra.mxu0 0.0
        %646 = vmatprep.subr.mxu0 0.0
        %647 = vmatpush1.msra.mxu0 0.0
        %648 = vmatprep.subr.mxu0 0.0
        %649 = vmatpush1.msra.mxu0 0.0
        %650 = vmatprep.subr.mxu0 0.0
        %651 = vmatpush1.msra.mxu0 0.0
        %652 = vmatprep.subr.mxu0 0.0
        %653 = vmatpush1.msra.mxu0 0.0
        %654 = vmatprep.subr.mxu0 0.0
        %655 = vmatpush1.msra.mxu0 0.0
        %656 = vmatprep.subr.mxu0 0.0
        %657 = vmatpush1.msra.mxu0 0.0
        %658 = vmatprep.subr.mxu0 0.0
        %659 = vmatpush1.msra.mxu0 0.0
        %660 = vmatprep.subr.mxu0 0.0
        %661 = vmatpush1.msra.mxu0 0.0
        %662 = vmatprep.subr.mxu0 0.0
        %663 = vmatpush1.msra.mxu0 0.0
        %664 = vmatprep.subr.mxu0 0.0
        %665 = vmatpush1.msra.mxu0 0.0
        %666 = vmatprep.subr.mxu0 0.0
        %667 = vmatpush1.msra.mxu0 0.0
        %668 = vmatprep.subr.mxu0 0.0
        %669 = vmatpush1.msra.mxu0 0.0
        %670 = vmatprep.subr.mxu0 0.0
        %671 = vmatpush1.msra.mxu0 0.0
        %672 = vmatprep.subr.mxu0 0.0
        %673 = vmatpush1.msra.mxu0 0.0
        %674 = vmatprep.subr.mxu0 0.0
        %675 = vmatpush1.msra.mxu0 0.0
        %676 = vmatprep.subr.mxu0 0.0
        %677 = vmatpush1.msra.mxu0 0.0
        %678 = vmatprep.subr.mxu0 0.0
        %679 = vmatpush1.msra.mxu0 0.0
        %680 = vmatprep.subr.mxu0 0.0
        %681 = vmatpush1.msra.mxu0 0.0
        %682 = vmatprep.subr.mxu0 0.0
        %683 = vmatpush1.msra.mxu0 0.0
        %684 = vmatprep.subr.mxu0 0.0
        %685 = vmatpush1.msra.mxu0 0.0
        %686 = vmatprep.mubr.f32.mxu0 0.0
        %687 = vmatmul.mubr.f32.gmra.mrb[0].mxu0 %v620
        %v688 = vpop.f32.mrb[0].mxu0
        %v689 = vadd.f32 %v617, %v688
        %v690 = vpop.f32.mrb[0].mxu0
        %691 = vdwg.mxu0
        %vm692 = vcmask 64512
        %693 = vst.msk [vmem:[%s323] sm:$0xff] %vm692, %v689
        %s694 = sand.u32 %s225, 1
        %s695 = scalar_lea.sflag [#allocation3], %s694
        %s696 = sand.u32 %s225, 1
        %s697 = smul.addr %s696, 8
        %s698 = scalar_lea.vmem [#allocation2], %s697
        // Predicated region
        $region57: #{mdn_forward_fused.1} parent=55 // pred_check
          %p699 = pneg %p235
        $region58: #{mdn_forward_fused.1} parent=55 // pred_check_branch
          %701 = sbr.rel (%p699) target = $region60
        $region59: #{mdn_forward_fused.1} parent=55 // pred_region
          %s703 = ssub.s32 128, 128
          %704 = vsyncadd %s695, %s703
          %s705 = smul.addr %s23, 128
          %s706 = scalar_lea.hbm %s9, %s705
          %s708 = sshll.u32 %s698, 4
          %s709 = int_to_ptr.vmem [resolvable:$true] %s708
          %711 = dma.vmem_to_hbm [thread:$0]  %s709, 128, %s706, %s695
        $region60: #{mdn_forward_fused.1} parent=55 // pred_fallthru
          _
      $region56: #{mdn_forward_fused.1} parent=5 // pred_fallthru
        _
      %p712 = scmp.le.s32.totalorder 2, %s18
      // Predicated region
      $region61: #{mdn_forward_fused.1} parent=5 // pred_check
        %p713 = pneg %p712
      $region62: #{mdn_forward_fused.1} parent=5 // pred_check_branch
        %715 = sbr.rel (%p713) target = $region64
      $region63: #{mdn_forward_fused.1} parent=5 // pred_region
        %s716 = ssub.s32 %s18, 2
        // Predicated region
        $region65: #{mdn_forward_fused.1} parent=63 // pred_check
          %p717 = pneg %p241
        $region66: #{mdn_forward_fused.1} parent=63 // pred_check_branch
          %719 = sbr.rel (%p717) target = $region68
        $region67: #{mdn_forward_fused.1} parent=63 // pred_region
          %s720 = sand.u32 %s226, 1
          %s721 = scalar_lea.sflag [#allocation3], %s720
          %s722 = sand.u32 %s226, 1
          %s723 = smul.addr %s722, 8
          %s724 = scalar_lea.vmem [#allocation2], %s723
          %725 = dma.done %s721, 128
        $region68: #{mdn_forward_fused.1} parent=63 // pred_fallthru
          _
      $region64: #{mdn_forward_fused.1} parent=5 // pred_fallthru
        _
    $region6: #{mdn_forward_fused.1} parent=1 // loop_footer
      %s22 = sadd.s32 1, %s18
    $region7: #{mdn_forward_fused.1} parent=1 // loop_footer_branch
      %17 = sbr.rel target = $region3
    $region8: #{mdn_forward_fused.1} parent=1 // loop_exit
      _
    %726 = vsyncpa [#allocation3], 1
    %s727 = scalar_lea.sflag [#allocation3], 1
    %728 = vsyncpa %s727, 1

</llo_original>
